<compile_context>
chip_gen: v7x
topology: tpu7x:2x2x1
jax: 0.10.0
libtpu: 0.0.40
codegen_flags: <defaults>
</compile_context>

<pallas_src>
import math

import jax
import jax.numpy as jnp
from jax.experimental import pallas as pl
from jax.experimental.pallas import tpu as pltpu

# Per-buffer block byte budget.  With 1 input + 1 output, each double-buffered,
# peak pipelined VMEM ~= 4 * _BLOCK_BYTES_CAP = 8 MiB, which fits comfortably in
# the scoped-VMEM budget of v5e (16 MiB default), v6e (32 MiB) and v7x (32 MiB
# of 64 MiB physical).  2 MiB f32 blocks (512K elements) are already well past
# the measured HBM-roofline saturation point (~85%+ at 512x128 = 256 KiB).
_BLOCK_BYTES_CAP = 2 << 20

# Skip the kernel entirely below this size: reshape is metadata-only in XLA,
# so for small tensors the pallas_call launch overhead would dominate.
_DEFAULT_MIN_KERNEL_BYTES = 1 << 20

# Candidate lane widths (all multiples of 128), widest first: lane-dense slabs
# give unmasked full-width stores and large DMA descriptors.
_LANE_CANDIDATES = (8192, 4096, 2048, 1024, 512, 256, 128)


def _copy_kernel(x_ref, o_ref):
    # Identity copy of the current (block_rows, lanes) tile.
    o_ref[...] = x_ref[...]


def _choose_layout(numel, itemsize):
    """Pick (lanes, rows, block_rows) for a pad-free lane-dense 2D factorization.

    Returns None if `numel` does not factor cleanly (caller falls back to a
    pure jnp.reshape -- no padding / slicing round-trips are ever emitted).
    """
    # dtype-aware minimal sublane count: 8 for 4-byte, 16 for 2-byte, 32 for 1-byte.
    min_sub = max(8, 32 // max(1, itemsize))
    lanes = None
    for w in _LANE_CANDIDATES:
        if numel % (w * min_sub) == 0:
            lanes = w
            break
    if lanes is None:
        return None
    rows = numel // lanes  # guaranteed to be a positive multiple of min_sub

    # Largest block (multiple of min_sub rows) under the per-buffer byte cap.
    max_rows = max(min_sub, _BLOCK_BYTES_CAP // (lanes * itemsize))
    block_rows = min(rows, (max_rows // min_sub) * min_sub)
    block_rows = max(block_rows, min_sub)
    return lanes, rows, block_rows


def _pallas_identity_copy_2d(x2d, block_rows):
    """x2d: (rows, lanes) slab, lanes % 128 == 0, block_rows % min_sublanes == 0."""
    rows, lanes = x2d.shape
    itemsize = jnp.dtype(x2d.dtype).itemsize
    grid = (pl.cdiv(rows, block_rows),)  # ragged tail handled by masked last block
    nbytes = rows * lanes * itemsize
    return pl.pallas_call(
        _copy_kernel,
        out_shape=jax.ShapeDtypeStruct((rows, lanes), x2d.dtype),
        grid_spec=pltpu.PrefetchScalarGridSpec(
            num_scalar_prefetch=0,
            grid=grid,
            in_specs=[pl.BlockSpec((block_rows, lanes), lambda i: (i, 0))],
            out_specs=pl.BlockSpec((block_rows, lanes), lambda i: (i, 0)),
        ),
        compiler_params=pltpu.CompilerParams(
            dimension_semantics=("parallel",),   # shards grid across TCs on v7x
            vmem_limit_bytes=32 << 20,
        ),
        cost_estimate=pl.CostEstimate(
            flops=0, transcendentals=0, bytes_accessed=2 * nbytes),
    )(x2d)


def _resolve_shape(shape, numel):
    """Resolve a torch-style view shape (possibly containing a single -1)."""
    shape = tuple(int(s) for s in shape)
    if -1 in shape:
        assert shape.count(-1) == 1, "only one -1 allowed in view shape"
        known = 1
        for s in shape:
            if s != -1:
                known *= s
        assert known != 0 and numel % known == 0, "view shape incompatible with numel"
        shape = tuple(numel // known if s == -1 else s for s in shape)
    assert math.prod(shape) == numel, "view shape incompatible with input numel"
    return shape


class Reshape:
    """JAX/Pallas equivalent of the torch Reshape module: forward(x) = x.view(*shape).

    By default small inputs take the metadata-only jnp.reshape fast path; set
    min_kernel_bytes=0 to force the Pallas identity-copy path.
    """

    def __init__(self, *args, min_kernel_bytes=_DEFAULT_MIN_KERNEL_BYTES):
        self.shape = args
        self.min_kernel_bytes = min_kernel_bytes

    def __repr__(self):
        return f"{self.__class__.__name__}{self.shape}"

    def __call__(self, x):
        return self.forward(x)

    def forward(self, x):
        numel = int(math.prod(x.shape)) if x.shape else 1
        target = _resolve_shape(self.shape, numel)
        itemsize = jnp.dtype(x.dtype).itemsize

        layout = _choose_layout(numel, itemsize)
        if layout is None or numel * itemsize < self.min_kernel_bytes:
            # Fast path: reshape is metadata-only in XLA; no HBM traffic at all.
            return jnp.reshape(x, target)

        lanes, rows, block_rows = layout
        # Flatten to the row-major element stream (matches torch .view on a
        # contiguous tensor) as a lane-dense 2D slab -- no padding, no slicing.
        x2d = jnp.reshape(x, (rows, lanes))
        y2d = _pallas_identity_copy_2d(x2d, block_rows)
        return jnp.reshape(y2d, target)


if __name__ == "__main__":
    key = jax.random.PRNGKey(0)
    # Small NCHW-shaped input consistent with typical usage of this module.
    x = jax.random.normal(key, (2, 4, 16, 16), dtype=jnp.float32)
    ref = jnp.reshape(x, (2, -1))

    # 1) Force the Pallas copy path so the kernel is exercised on TPU.
    reshape_kernel = Reshape(2, -1, min_kernel_bytes=0)
    y = reshape_kernel(x)
    y = jax.block_until_ready(y)
    assert y.shape == (2, 1024), y.shape
    assert y.dtype == x.dtype
    assert bool(jnp.all(y == ref))

    # 2) Default behavior: small input takes the metadata-only fast path.
    reshape_fast = Reshape(2, -1)
    y_fast = jax.block_until_ready(reshape_fast(x))
    assert y_fast.shape == (2, 1024)
    assert bool(jnp.all(y_fast == ref))

    print("KERNEL_OK")
</pallas_src>

<mosaic_0001>
module attributes {stable_mosaic.version = 11 : i64} {
  func.func @_copy_kernel(%arg0: i32, %arg1: memref<8x256xf32, #tpu.memory_space<vmem>>, %arg2: memref<8x256xf32, #tpu.memory_space<vmem>>) attributes {dimension_semantics = [#tpu.dimension_semantics<parallel>], iteration_bounds = array<i64: 1>, scalar_prefetch = 0 : i64, scratch_operands = 0 : i64, tpu.core_type = #tpu.core_type<tc>, window_params = [{transform_indices = @transform_0, window_bounds = array<i64: 8, 256>}, {transform_indices = @transform_1, window_bounds = array<i64: 8, 256>}]} {
    %c0 = arith.constant 0 : index
    %c0_0 = arith.constant 0 : index
    %0 = vector.load %arg1[%c0, %c0_0] : memref<8x256xf32, #tpu.memory_space<vmem>>, vector<8x256xf32>
    %c0_1 = arith.constant 0 : index
    %c0_2 = arith.constant 0 : index
    %1 = vector.load %arg2[%c0_1, %c0_2] : memref<8x256xf32, #tpu.memory_space<vmem>>, vector<8x256xf32>
    tpu.vector_store %arg2[%c0_1, %c0_2], %0 {strides = array<i32>} : memref<8x256xf32, #tpu.memory_space<vmem>>, vector<8x256xf32>,
    return
  }
  func.func @transform_0(%arg0: i32) -> (i32, i32) {
    %c0_i32 = arith.constant 0 : i32
    %c0_i32_0 = arith.constant 0 : i32
    return %arg0, %c0_i32 : i32, i32
  }
  func.func @transform_1(%arg0: i32) -> (i32, i32) {
    %c0_i32 = arith.constant 0 : i32
    %c0_i32_0 = arith.constant 0 : i32
    return %arg0, %c0_i32 : i32, i32
  }
}

</mosaic_0001>

<llo_original>
// kernel: tpu_custom_call.1
$region0: #{tpu_custom_call.1}
  #allocation0 [shape = 'u32[]', space=smem, size = 0x4, offset = 0x4, fixed_abs, tag = 'smem constant byte address 0x4 - core index']
  #allocation1 [shape = 'u32[144,128]{1,0:T(1,128)}', space=vmem, size = 0x12000, scoped, tag = 'internal scratch']
  %s0 = inlined_call_operand.hbm [shape: f32[8,256], index: 0, kind: input, shape index: {}]
  %s1 = inlined_call_operand.hbm [shape: f32[8,256], index: 1, kind: output, shape index: {}]
  %s2 = sld [smem:[#allocation0]]
  $region18: #{tpu_custom_call.1} parent=0
    _
  %s4 = ssub.s32 1, %s2
  %s5 = scalar_select 0, %s4, %s2
  $region1: #{tpu_custom_call.1} parent=0
    #allocation2 [shape = 'u8[8192]{0}', space=vmem, size = 0x2000, scoped, tag = 'input window, operand 0, single buffered']
    #allocation3 [shape = 's32[1]{0}', space=sflag, size = 0x4, scoped, tag = 'scoped memory for tpu_custom_call.1']
    #allocation4 [shape = 's32[1]{0}', space=sflag, size = 0x4, scoped, tag = 'scoped memory for tpu_custom_call.1']
    #allocation5 [shape = 'u8[8192]{0}', space=vmem, size = 0x2000, scoped, tag = 'output window, operand 0, single buffered']
    %6 = vsyncpa [#allocation3], 0
    %7 = vsyncpa [#allocation4], 0
    // Predicated region
    $region2: #{tpu_custom_call.1} parent=1 // pred_check
      _
    $region3: #{tpu_custom_call.1} parent=1 // pred_check_branch
      %9 = sbr.rel (0) target = $region5
    $region4: #{tpu_custom_call.1} parent=1 // pred_region
      %s11 = ssub.s32 256, 256
      %12 = vsyncadd [#allocation3], %s11
      %s14 = sshll.u32 [#allocation2], 4
      %s15 = int_to_ptr.vmem [resolvable:$true] %s14
      %17 = dma.hbm_to_vmem [thread:$0]  %s0, 256, %s15, [#allocation3]
    $region5: #{tpu_custom_call.1} parent=1 // pred_fallthru
      _
    // Predicated region
    $region6: #{tpu_custom_call.1} parent=1 // pred_check
      _
    $region7: #{tpu_custom_call.1} parent=1 // pred_check_branch
      %19 = sbr.rel (0) target = $region9
    $region8: #{tpu_custom_call.1} parent=1 // pred_region
      %20 = dma.done [#allocation3], 256
    $region9: #{tpu_custom_call.1} parent=1 // pred_fallthru
      _
    %v21 = vld [vmem:[#allocation2] sm:$0xff]
    %v22 = vld [vmem:[#allocation2 + $0x8] sm:$0xff]
    %23 = vst [vmem:[#allocation5] sm:$0xff] %v21
    %24 = vst [vmem:[#allocation5 + $0x8] sm:$0xff] %v22
    // Predicated region
    $region10: #{tpu_custom_call.1} parent=1 // pred_check
      _
    $region11: #{tpu_custom_call.1} parent=1 // pred_check_branch
      %26 = sbr.rel (0) target = $region13
    $region12: #{tpu_custom_call.1} parent=1 // pred_region
      %s28 = ssub.s32 256, 256
      %29 = vsyncadd [#allocation4], %s28
      %s31 = sshll.u32 [#allocation5], 4
      %s32 = int_to_ptr.vmem [resolvable:$true] %s31
      %34 = dma.vmem_to_hbm [thread:$0]  %s32, 256, %s1, [#allocation4]
    $region13: #{tpu_custom_call.1} parent=1 // pred_fallthru
      _
    // Predicated region
    $region14: #{tpu_custom_call.1} parent=1 // pred_check
      _
    $region15: #{tpu_custom_call.1} parent=1 // pred_check_branch
      %36 = sbr.rel (0) target = $region17
    $region16: #{tpu_custom_call.1} parent=1 // pred_region
      %37 = dma.done [#allocation4], 256
    $region17: #{tpu_custom_call.1} parent=1 // pred_fallthru
      _
    %38 = vsyncpa [#allocation3], 1
    %39 = vsyncpa [#allocation4], 1

</llo_original>
